<compile_context>
chip_gen: v7x
topology: tpu7x:2x2x1
jax: 0.10.0
libtpu: 0.0.40
codegen_flags: <defaults>
</compile_context>

<pallas_src>
import functools

import jax
import jax.numpy as jnp
from jax.experimental import pallas as pl
from jax.experimental.pallas import tpu as pltpu


_LANE = 128          # hidden/output feature dims padded to this inside VMEM
_MAX_TILE_M = 1024   # rows per grid step (memory-bound sweet spot per review)


def _round_up(x, m):
    return (x + m - 1) // m * m


def _resident_spec(arr):
    """Full-array block with constant index map -> fetched once, stays in VMEM."""
    nd = arr.ndim
    return pl.BlockSpec(arr.shape, lambda i: (0,) * nd)


def _shop_mlp_kernel(piece_meta, n_layers, *refs):
    """Fused shop-MLP on one (TILE_M, ...) row block.

    refs layout:
      refs[0:n_p]    activation pieces, (TILE_M, w_k) (f32 or bf16)
      refs[n_p]      packed layer-0 weight, (K0_pad, P) bf16; piece k occupies
                     rows piece_meta[k][0] : piece_meta[k][0] + piece_meta[k][1]
      refs[n_p + 1]  packed biases, (L, 1, P) f32
      refs[n_p + 2]  packed deeper weights, (L-1, P, P) bf16  [only if L > 1]
      refs[-1]       output, (TILE_M, d_out)
    """
    n_p = len(piece_meta)
    acts = refs[:n_p]
    w0_ref = refs[n_p]
    b_ref = refs[n_p + 1]
    w_rest_ref = refs[n_p + 2] if n_layers > 1 else None
    out_ref = refs[-1]

    # ---- layer 0: fused "concat + Linear" as a sum of MXU partial dots -----
    # Every piece (including the stacked width-1 features) hits the MXU in
    # bf16 with f32 accumulation; no rank-1 VPU multiply-adds remain.
    acc = None
    for (off, width), a_ref in zip(piece_meta, acts):
        part = jnp.dot(a_ref[...].astype(jnp.bfloat16),
                       w0_ref[off:off + width, :],
                       preferred_element_type=jnp.float32)
        acc = part if acc is None else acc + part
    h = jnp.maximum(acc + b_ref[0], 0.0)          # bias + ReLU in f32

    # ---- layers 1..L-1: dense Linear + ReLU (bf16 MXU, f32 accumulate) -----
    for l in range(1, n_layers):
        h = jnp.dot(h.astype(jnp.bfloat16), w_rest_ref[l - 1],
                    preferred_element_type=jnp.float32) + b_ref[l]
        h = jnp.maximum(h, 0.0)

    # Narrow store: only d_out lanes are written (the 128-padded slab would
    # 4x the HBM write traffic of this memory-bound kernel).
    out_ref[...] = h[:, :out_ref.shape[-1]].astype(out_ref.dtype)


def _pack_params(weights, biases, splits, p_lanes):
    """Pack all parameters into 3 small VMEM-resident slabs."""
    n_layers = len(weights)
    n0 = weights[0].shape[1]

    # Layer-0 weight: per-piece row blocks at 8-aligned sublane offsets.
    piece_meta = []
    rows = []
    off = 0
    src = 0
    for width in splits:
        piece_meta.append((off, width))
        rows.append((off, src, width))
        off += _round_up(width, 8)
        src += width
    k0_pad = _round_up(off, 8)
    w0p = jnp.zeros((k0_pad, p_lanes), jnp.float32)
    for off_k, src_r, width in rows:
        w0p = w0p.at[off_k:off_k + width, :n0].set(weights[0][src_r:src_r + width, :])
    w0p = w0p.astype(jnp.bfloat16)

    # All biases in one (L, 1, P) f32 slab (bias add / ReLU stay in f32).
    b_all = jnp.zeros((n_layers, 1, p_lanes), jnp.float32)
    for l, b in enumerate(biases):
        b_all = b_all.at[l, 0, :b.shape[0]].set(b)

    # Deeper weights in one (L-1, P, P) bf16 slab.  Zero padding is exact:
    # padded output columns get bias 0 -> relu(0) = 0, so padded input columns
    # of h are always zero.
    w_rest = None
    if n_layers > 1:
        w_rest = jnp.zeros((n_layers - 1, p_lanes, p_lanes), jnp.float32)
        for l in range(1, n_layers):
            w = weights[l]
            w_rest = w_rest.at[l - 1, :w.shape[0], :w.shape[1]].set(w)
        w_rest = w_rest.astype(jnp.bfloat16)

    return tuple(piece_meta), w0p, b_all, w_rest


def shop_mlp_pallas(act_pieces, weights, biases, *, out_dtype=jnp.float32,
                    max_tile_m=_MAX_TILE_M):
    """Fused MLP over row-tiled activation pieces.

    act_pieces: list of (M, w_k) arrays whose column-concatenation (in order)
                is the MLP input; the concat itself happens inside the kernel.
                f32 or bf16 accepted (cast to bf16 for the MXU either way).
    weights:    list of (in, out) f32 Linear weights (x @ W + b convention).
    biases:     list of (out,) f32 biases.
    """
    splits = [int(p.shape[1]) for p in act_pieces]
    n_layers = len(weights)
    assert n_layers >= 1
    assert weights[0].shape[0] == sum(splits), "layer-0 in_features mismatch"

    M = act_pieces[0].shape[0]
    d_out = int(weights[-1].shape[1])
    p_lanes = max(_round_up(int(w.shape[1]), _LANE) for w in weights)

    # Tile/grid selection: big tiles (overhead + HBM bound), minimal row
    # padding, and >= 2 grid steps when possible so v7x can use both cores.
    n_steps = max(1, min(pl.cdiv(M, 8), max(2, pl.cdiv(M, max_tile_m))))
    tile_m = _round_up(pl.cdiv(M, n_steps), 8)
    m_pad = tile_m * n_steps
    if m_pad != M:   # pad rows so the grid tiles exactly; sliced off below
        act_pieces = [jnp.pad(a, ((0, m_pad - M), (0, 0))) for a in act_pieces]

    piece_meta, w0p, b_all, w_rest = _pack_params(weights, biases, splits, p_lanes)

    args = list(act_pieces) + [w0p, b_all]
    in_specs = [pl.BlockSpec((tile_m, int(a.shape[1])), lambda i: (i, 0))
                for a in act_pieces]
    in_specs += [_resident_spec(w0p), _resident_spec(b_all)]
    if w_rest is not None:
        args.append(w_rest)
        in_specs.append(_resident_spec(w_rest))

    out = pl.pallas_call(
        functools.partial(_shop_mlp_kernel, piece_meta, n_layers),
        out_shape=jax.ShapeDtypeStruct((m_pad, d_out), out_dtype),
        grid=(n_steps,),
        in_specs=in_specs,
        out_specs=pl.BlockSpec((tile_m, d_out), lambda i: (i, 0)),
        compiler_params=pltpu.CompilerParams(
            dimension_semantics=("parallel",)),  # v7x: shard rows across TCs
    )(*args)

    if m_pad != M:
        out = out[:M]
    return out


def cnn_shop_mlp_forward(params, shops_embedding, distances_embedding,
                         ratings, comments, prices_embedding, group):
    """JAX/Pallas equivalent of CNN_Shop_MLP.forward."""
    B, S = ratings.shape
    m = B * S
    d_sh = shops_embedding.shape[-1]
    d_di = distances_embedding.shape[-1]
    d_pr = prices_embedding.shape[-1]

    # Feature pieces fed to the kernel (metadata reshapes, plus one tiny stack
    # of the width-1 features into a single (M, 3) stream).
    pieces = [
        shops_embedding.reshape(m, d_sh),
        distances_embedding.reshape(m, d_di),
        prices_embedding.reshape(m, d_pr),
        jnp.stack([ratings.reshape(m), comments.reshape(m), group.reshape(m)],
                  axis=-1),
    ]

    # Permute W0 rows from the original torch.cat order
    # [shops, distances, ratings, comments, prices, group] to the piece order
    # [shops, distances, prices, (ratings, comments, group)].
    o_r = d_sh + d_di            # ratings column in the original concat
    o_c = o_r + 1                # comments
    o_p = o_c + 1                # prices start
    o_g = o_p + d_pr             # group
    perm = (list(range(d_sh + d_di)) +
            list(range(o_p, o_p + d_pr)) +
            [o_r, o_c, o_g])
    w0_perm = params["weights"][0][jnp.asarray(perm), :]
    weights = [w0_perm] + list(params["weights"][1:])

    out2d = shop_mlp_pallas(pieces, weights, params["biases"])
    return out2d.reshape(B, S, -1)


def init_params(key, layer_sizes):
    """Deterministic init matching torch.nn.Linear default (uniform +-1/sqrt(in))."""
    weights, biases = [], []
    for in_size, out_size in zip(layer_sizes[:-1], layer_sizes[1:]):
        key, kw, kb = jax.random.split(key, 3)
        bound = 1.0 / jnp.sqrt(jnp.float32(in_size))
        w = jax.random.uniform(kw, (in_size, out_size), jnp.float32, -bound, bound)
        b = jax.random.uniform(kb, (out_size,), jnp.float32, -bound, bound)
        weights.append(w)
        biases.append(b)
    return {"weights": weights, "biases": biases}


def _reference_forward(params, shops, dist, ratings, comments, prices, group):
    """Pure-JAX f32 reference mirroring the PyTorch module exactly."""
    vec = jnp.concatenate(
        [shops, dist, ratings[..., None], comments[..., None],
         prices, group[..., None]], axis=-1)
    h = vec
    for w, b in zip(params["weights"], params["biases"]):
        h = jnp.maximum(jnp.einsum("bsd,de->bse", h, w) + b, 0.0)
    return h


def _run_case(key, B, S, layer_sizes):
    k0, k1, k2, k3, k4, k5, kp = jax.random.split(key, 7)
    shops = jax.random.normal(k0, (B, S, 16), jnp.float32)
    dist = jax.random.normal(k1, (B, S, 8), jnp.float32)
    ratings = jax.random.normal(k2, (B, S), jnp.float32)
    comments = jax.random.normal(k3, (B, S), jnp.float32)
    prices = jax.random.normal(k4, (B, S, 5), jnp.float32)
    group = jax.random.normal(k5, (B, S), jnp.float32)
    params = init_params(kp, layer_sizes)

    fwd = jax.jit(cnn_shop_mlp_forward)
    out = jax.block_until_ready(
        fwd(params, shops, dist, ratings, comments, prices, group))

    ref = _reference_forward(params, shops, dist, ratings, comments, prices, group)
    assert out.shape == (B, S, layer_sizes[-1]), (out.shape, layer_sizes)
    # All 32 input columns now go through bf16 MXU dots (f32 accumulation), so
    # the tolerance vs. the f32 reference is slightly looser than pure f32.
    assert jnp.allclose(out, ref, atol=3e-2, rtol=3e-2), \
        float(jnp.max(jnp.abs(out - ref)))


if __name__ == "__main__":
    # Concat feature dim = 16 + 8 + 1 + 1 + 5 + 1 = 32 = shop_mlp_layers[0].
    root = jax.random.PRNGKey(0)
    k_small, k_big = jax.random.split(root)

    # Small toy case: M = 16 rows -> 2 grid steps of 8 rows.
    _run_case(k_small, B=2, S=8, layer_sizes=[32, 64, 32])
    # Larger case: M = 800 rows -> 2 grid steps of 400 rows, zero row padding
    # (exercises M-tiling, packed VMEM-resident params, dual-core sharding).
    _run_case(k_big, B=4, S=200, layer_sizes=[32, 64, 32])

    print("KERNEL_OK")
</pallas_src>

<mosaic_0001>
module attributes {stable_mosaic.version = 11 : i64} {
  func.func @_shop_mlp_kernel(%arg0: i32, %arg1: memref<8x16xf32, #tpu.memory_space<vmem>>, %arg2: memref<8x8xf32, #tpu.memory_space<vmem>>, %arg3: memref<8x5xf32, #tpu.memory_space<vmem>>, %arg4: memref<8x3xf32, #tpu.memory_space<vmem>>, %arg5: memref<40x128xbf16, #tpu.memory_space<vmem>>, %arg6: memref<2x1x128xf32, #tpu.memory_space<vmem>>, %arg7: memref<1x128x128xbf16, #tpu.memory_space<vmem>>, %arg8: memref<8x32xf32, #tpu.memory_space<vmem>>) attributes {dimension_semantics = [#tpu.dimension_semantics<parallel>], iteration_bounds = array<i64: 2>, scalar_prefetch = 0 : i64, scratch_operands = 0 : i64, tpu.core_type = #tpu.core_type<tc>, window_params = [{transform_indices = @transform_0, window_bounds = array<i64: 8, 16>}, {transform_indices = @transform_1, window_bounds = array<i64: 8, 8>}, {transform_indices = @transform_2, window_bounds = array<i64: 8, 5>}, {transform_indices = @transform_3, window_bounds = array<i64: 8, 3>}, {pipeline_mode = #tpu.pipeline_mode<synchronous>, transform_indices = @transform_4, window_bounds = array<i64: 40, 128>}, {pipeline_mode = #tpu.pipeline_mode<synchronous>, transform_indices = @transform_5, window_bounds = array<i64: 2, 1, 128>}, {pipeline_mode = #tpu.pipeline_mode<synchronous>, transform_indices = @transform_6, window_bounds = array<i64: 1, 128, 128>}, {transform_indices = @transform_7, window_bounds = array<i64: 8, 32>}]} {
    %c0 = arith.constant 0 : index
    %c0_0 = arith.constant 0 : index
    %0 = vector.load %arg1[%c0, %c0_0] : memref<8x16xf32, #tpu.memory_space<vmem>>, vector<8x16xf32>
    %1 = arith.truncf %0 : vector<8x16xf32> to vector<8x16xbf16>
    %c0_1 = arith.constant 0 : index
    %c0_2 = arith.constant 0 : index
    %2 = vector.load %arg5[%c0_1, %c0_2] : memref<40x128xbf16, #tpu.memory_space<vmem>>, vector<16x128xbf16>
    %cst = arith.constant dense<0.000000e+00> : vector<8x128xf32>
    %3 = tpu.matmul %1, %2, %cst {dimension_numbers = #tpu.dot_dimension_numbers<[1], [0], [0], [1], [0, 0, 1, 1], [], []>} : vector<8x16xbf16>, vector<16x128xbf16>, vector<8x128xf32> -> vector<8x128xf32>
    %c0_3 = arith.constant 0 : index
    %c0_4 = arith.constant 0 : index
    %4 = vector.load %arg2[%c0_3, %c0_4] : memref<8x8xf32, #tpu.memory_space<vmem>>, vector<8x8xf32>
    %5 = arith.truncf %4 : vector<8x8xf32> to vector<8x8xbf16>
    %c16 = arith.constant 16 : index
    %c0_5 = arith.constant 0 : index
    %6 = vector.load %arg5[%c16, %c0_5] : memref<40x128xbf16, #tpu.memory_space<vmem>>, vector<8x128xbf16>
    %cst_6 = arith.constant dense<0.000000e+00> : vector<8x128xf32>
    %7 = tpu.matmul %5, %6, %cst_6 {dimension_numbers = #tpu.dot_dimension_numbers<[1], [0], [0], [1], [0, 0, 1, 1], [], []>} : vector<8x8xbf16>, vector<8x128xbf16>, vector<8x128xf32> -> vector<8x128xf32>
    %8 = arith.addf %3, %7 : vector<8x128xf32>
    %c0_7 = arith.constant 0 : index
    %c0_8 = arith.constant 0 : index
    %9 = vector.load %arg3[%c0_7, %c0_8] : memref<8x5xf32, #tpu.memory_space<vmem>>, vector<8x5xf32>
    %10 = arith.truncf %9 : vector<8x5xf32> to vector<8x5xbf16>
    %c24 = arith.constant 24 : index
    %c0_9 = arith.constant 0 : index
    %11 = vector.load %arg5[%c24, %c0_9] : memref<40x128xbf16, #tpu.memory_space<vmem>>, vector<5x128xbf16>
    %cst_10 = arith.constant dense<0.000000e+00> : vector<8x128xf32>
    %12 = tpu.matmul %10, %11, %cst_10 {dimension_numbers = #tpu.dot_dimension_numbers<[1], [0], [0], [1], [0, 0, 1, 1], [], []>} : vector<8x5xbf16>, vector<5x128xbf16>, vector<8x128xf32> -> vector<8x128xf32>
    %13 = arith.addf %8, %12 : vector<8x128xf32>
    %c0_11 = arith.constant 0 : index
    %c0_12 = arith.constant 0 : index
    %14 = vector.load %arg4[%c0_11, %c0_12] : memref<8x3xf32, #tpu.memory_space<vmem>>, vector<8x3xf32>
    %15 = arith.truncf %14 : vector<8x3xf32> to vector<8x3xbf16>
    %c32 = arith.constant 32 : index
    %c0_13 = arith.constant 0 : index
    %16 = vector.load %arg5[%c32, %c0_13] : memref<40x128xbf16, #tpu.memory_space<vmem>>, vector<3x128xbf16>
    %cst_14 = arith.constant dense<0.000000e+00> : vector<8x128xf32>
    %17 = tpu.matmul %15, %16, %cst_14 {dimension_numbers = #tpu.dot_dimension_numbers<[1], [0], [0], [1], [0, 0, 1, 1], [], []>} : vector<8x3xbf16>, vector<3x128xbf16>, vector<8x128xf32> -> vector<8x128xf32>
    %18 = arith.addf %13, %17 : vector<8x128xf32>
    %c0_15 = arith.constant 0 : index
    %c0_16 = arith.constant 0 : index
    %c0_17 = arith.constant 0 : index
    %19 = vector.load %arg6[%c0_15, %c0_16, %c0_17] : memref<2x1x128xf32, #tpu.memory_space<vmem>>, vector<1x1x128xf32>
    %20 = vector.shape_cast %19 : vector<1x1x128xf32> to vector<1x128xf32>
    %21 = vector.broadcast %20 : vector<1x128xf32> to vector<8x128xf32>
    %22 = arith.addf %18, %21 : vector<8x128xf32>
    %cst_18 = arith.constant 0.000000e+00 : f32
    %23 = vector.broadcast %cst_18 : f32 to vector<8x128xf32>
    %24 = arith.maximumf %22, %23 : vector<8x128xf32>
    %25 = arith.truncf %24 : vector<8x128xf32> to vector<8x128xbf16>
    %c0_19 = arith.constant 0 : index
    %c0_20 = arith.constant 0 : index
    %c0_21 = arith.constant 0 : index
    %26 = vector.load %arg7[%c0_19, %c0_20, %c0_21] : memref<1x128x128xbf16, #tpu.memory_space<vmem>>, vector<1x128x128xbf16>
    %27 = vector.shape_cast %26 : vector<1x128x128xbf16> to vector<128x128xbf16>
    %cst_22 = arith.constant dense<0.000000e+00> : vector<8x128xf32>
    %28 = tpu.matmul %25, %27, %cst_22 {dimension_numbers = #tpu.dot_dimension_numbers<[1], [0], [0], [1], [0, 0, 1, 1], [], []>} : vector<8x128xbf16>, vector<128x128xbf16>, vector<8x128xf32> -> vector<8x128xf32>
    %c1 = arith.constant 1 : index
    %c0_23 = arith.constant 0 : index
    %c0_24 = arith.constant 0 : index
    %29 = vector.load %arg6[%c1, %c0_23, %c0_24] : memref<2x1x128xf32, #tpu.memory_space<vmem>>, vector<1x1x128xf32>
    %30 = vector.shape_cast %29 : vector<1x1x128xf32> to vector<1x128xf32>
    %31 = vector.broadcast %30 : vector<1x128xf32> to vector<8x128xf32>
    %32 = arith.addf %28, %31 : vector<8x128xf32>
    %cst_25 = arith.constant 0.000000e+00 : f32
    %33 = vector.broadcast %cst_25 : f32 to vector<8x128xf32>
    %34 = arith.maximumf %32, %33 : vector<8x128xf32>
    %35 = vector.extract_strided_slice %34 {offsets = [0, 0], sizes = [8, 32], strides = [1, 1]} : vector<8x128xf32> to vector<8x32xf32>
    %c0_26 = arith.constant 0 : index
    %c0_27 = arith.constant 0 : index
    %36 = vector.load %arg8[%c0_26, %c0_27] : memref<8x32xf32, #tpu.memory_space<vmem>>, vector<8x32xf32>
    tpu.vector_store %arg8[%c0_26, %c0_27], %35 {strides = array<i32>} : memref<8x32xf32, #tpu.memory_space<vmem>>, vector<8x32xf32>,
    return
  }
  func.func @transform_0(%arg0: i32) -> (i32, i32) {
    %c0_i32 = arith.constant 0 : i32
    %c0_i32_0 = arith.constant 0 : i32
    return %arg0, %c0_i32 : i32, i32
  }
  func.func @transform_1(%arg0: i32) -> (i32, i32) {
    %c0_i32 = arith.constant 0 : i32
    %c0_i32_0 = arith.constant 0 : i32
    return %arg0, %c0_i32 : i32, i32
  }
  func.func @transform_2(%arg0: i32) -> (i32, i32) {
    %c0_i32 = arith.constant 0 : i32
    %c0_i32_0 = arith.constant 0 : i32
    return %arg0, %c0_i32 : i32, i32
  }
  func.func @transform_3(%arg0: i32) -> (i32, i32) {
    %c0_i32 = arith.constant 0 : i32
    %c0_i32_0 = arith.constant 0 : i32
    return %arg0, %c0_i32 : i32, i32
  }
  func.func @transform_4(%arg0: i32) -> (i32, i32) {
    %c0_i32 = arith.constant 0 : i32
    %c0_i32_0 = arith.constant 0 : i32
    %c0_i32_1 = arith.constant 0 : i32
    return %c0_i32, %c0_i32_0 : i32, i32
  }
  func.func @transform_5(%arg0: i32) -> (i32, i32, i32) {
    %c0_i32 = arith.constant 0 : i32
    %c0_i32_0 = arith.constant 0 : i32
    %c0_i32_1 = arith.constant 0 : i32
    %c0_i32_2 = arith.constant 0 : i32
    return %c0_i32, %c0_i32_0, %c0_i32_1 : i32, i32, i32
  }
  func.func @transform_6(%arg0: i32) -> (i32, i32, i32) {
    %c0_i32 = arith.constant 0 : i32
    %c0_i32_0 = arith.constant 0 : i32
    %c0_i32_1 = arith.constant 0 : i32
    %c0_i32_2 = arith.constant 0 : i32
    return %c0_i32, %c0_i32_0, %c0_i32_1 : i32, i32, i32
  }
  func.func @transform_7(%arg0: i32) -> (i32, i32) {
    %c0_i32 = arith.constant 0 : i32
    %c0_i32_0 = arith.constant 0 : i32
    return %arg0, %c0_i32 : i32, i32
  }
}

</mosaic_0001>

<llo_original>
// kernel: cnn_shop_mlp_forward.1
$region0: #{cnn_shop_mlp_forward.1}
  #allocation0 [shape = 'u32[]', space=smem, size = 0x4, offset = 0x4, fixed_abs, tag = 'smem constant byte address 0x4 - core index']
  #allocation1 [shape = 'u32[144,128]{1,0:T(1,128)}', space=vmem, size = 0x12000, scoped, tag = 'internal scratch']
  %s0 = inlined_call_operand.vmem [shape: f32[16,16], index: 0, kind: input, shape index: {}]
  %s1 = inlined_call_operand.vmem [shape: f32[16,8], index: 1, kind: input, shape index: {}]
  %s2 = inlined_call_operand.vmem [shape: f32[16,5], index: 2, kind: input, shape index: {}]
  %s3 = inlined_call_operand.vmem [shape: f32[16,3], index: 3, kind: input, shape index: {}]
  %s4 = inlined_call_operand.vmem [shape: bf16[40,128], index: 4, kind: input, shape index: {}]
  %s5 = inlined_call_operand.vmem [shape: f32[2,1,128], index: 5, kind: input, shape index: {}]
  %s6 = inlined_call_operand.vmem [shape: bf16[1,128,128], index: 6, kind: input, shape index: {}]
  %s7 = inlined_call_operand.hbm [shape: f32[16,32], index: 7, kind: output, shape index: {}]
  %s8 = sld [smem:[#allocation0]]
  $region61: #{cnn_shop_mlp_forward.1} parent=0
    _
  %s10 = ssub.s32 1, %s8
  %s11 = scalar_select 0, %s10, %s8
  $region1: #{cnn_shop_mlp_forward.1} parent=0
    #allocation2 [shape = 'u8[8192]{0}', space=vmem, size = 0x2000, scoped, tag = 'output window, operand 0']
    #allocation3 [shape = 's32[2]{0}', space=sflag, size = 0x8, scoped, tag = 'scoped memory for cnn_shop_mlp_forward.1']
    %12 = vsyncpa [#allocation3], 0
    %s13 = scalar_lea.sflag [#allocation3], 1
    %14 = vsyncpa %s13, 0
    loop: start=0, step=1, limit=4
    $region2: #{cnn_shop_mlp_forward.1} parent=1 // loop_pre_header
      _
    $region3: #{cnn_shop_mlp_forward.1} parent=1 // loop_header
      %s16 = sphi 0, %s20
      %p17 = scmp.ge.s32.totalorder %s16, 4
      %s26 = sphi 0, %s28
      %s29 = sphi 0, %s26
      %s30 = sphi 0, %s29
      %s46 = sphi 0, %s30
      %s52 = sphi 0, %s54
      %s55 = sphi 0, %s52
      %s56 = sphi 0, %s55
      %s72 = sphi 0, %s56
      %s78 = sphi 0, %s80
      %s81 = sphi 0, %s78
      %s82 = sphi 0, %s81
      %s98 = sphi 0, %s82
      %s104 = sphi 0, %s106
      %s107 = sphi 0, %s104
      %s108 = sphi 0, %s107
      %s124 = sphi 0, %s108
      %s128 = sphi 0, %s128
      %s130 = sphi 0, %s128
      %s131 = sphi 0, %s130
      %s145 = sphi 0, %s131
      %s149 = sphi 0, %s149
      %s151 = sphi 0, %s149
      %s152 = sphi 0, %s151
      %s166 = sphi 0, %s152
      %s170 = sphi 0, %s170
      %s172 = sphi 0, %s170
      %s173 = sphi 0, %s172
      %s187 = sphi 0, %s173
      %s193 = sphi 0, %s195
      %s196 = sphi 0, %s193
      %s197 = sphi 0, %s196
      %s213 = sphi 0, %s197
    $region4: #{cnn_shop_mlp_forward.1} parent=1 // loop_header_branch
      %19 = sbr.rel (%p17) target = $region8
    $region5: #{cnn_shop_mlp_forward.1} parent=1 // loop_body
      %s21 = ssub.s32 %s16, 1
      %s22 = ssub.s32 %s16, 2
      %s23 = sadd.s32 %s16, 1
      %s24 = ssub.s32 %s16, %s23
      %p25 = scmp.eq.s32.totalorder %s24, 0
      %s27 = sadd.s32 %s26, 1
      %s28 = scalar_select %p25, %s26, %s27
      %p31 = pneg %p25
      %p32 = scmp.eq.s32.totalorder %s16, 1
      %p33 = por %p31, %p32
      %p34 = scmp.ne.s32.totalorder %s26, %s29
      %p35 = scmp.eq.s32.totalorder %s16, 0
      %p36 = por %p34, %p35
      %p37 = scmp.ne.s32.totalorder %s26, %s29
      %p38 = scmp.eq.s32.totalorder %s21, 1
      %p39 = por %p37, %p38
      %p40 = scmp.ne.s32.totalorder %s29, %s30
      %p41 = scmp.eq.s32.totalorder %s21, 0
      %p42 = por %p40, %p41
      %p43 = scmp.ne.s32.totalorder %s29, %s30
      %p44 = scmp.eq.s32.totalorder %s22, 1
      %p45 = por %p43, %p44
      %p47 = scmp.ne.s32.totalorder %s30, %s46
      %p48 = scmp.eq.s32.totalorder %s22, 0
      %p49 = por %p47, %p48
      %s50 = ssub.s32 %s16, %s23
      %p51 = scmp.eq.s32.totalorder %s50, 0
      %s53 = sadd.s32 %s52, 1
      %s54 = scalar_select %p51, %s52, %s53
      %p57 = pneg %p51
      %p58 = scmp.eq.s32.totalorder %s16, 1
      %p59 = por %p57, %p58
      %p60 = scmp.ne.s32.totalorder %s52, %s55
      %p61 = scmp.eq.s32.totalorder %s16, 0
      %p62 = por %p60, %p61
      %p63 = scmp.ne.s32.totalorder %s52, %s55
      %p64 = scmp.eq.s32.totalorder %s21, 1
      %p65 = por %p63, %p64
      %p66 = scmp.ne.s32.totalorder %s55, %s56
      %p67 = scmp.eq.s32.totalorder %s21, 0
      %p68 = por %p66, %p67
      %p69 = scmp.ne.s32.totalorder %s55, %s56
      %p70 = scmp.eq.s32.totalorder %s22, 1
      %p71 = por %p69, %p70
      %p73 = scmp.ne.s32.totalorder %s56, %s72
      %p74 = scmp.eq.s32.totalorder %s22, 0
      %p75 = por %p73, %p74
      %s76 = ssub.s32 %s16, %s23
      %p77 = scmp.eq.s32.totalorder %s76, 0
      %s79 = sadd.s32 %s78, 1
      %s80 = scalar_select %p77, %s78, %s79
      %p83 = pneg %p77
      %p84 = scmp.eq.s32.totalorder %s16, 1
      %p85 = por %p83, %p84
      %p86 = scmp.ne.s32.totalorder %s78, %s81
      %p87 = scmp.eq.s32.totalorder %s16, 0
      %p88 = por %p86, %p87
      %p89 = scmp.ne.s32.totalorder %s78, %s81
      %p90 = scmp.eq.s32.totalorder %s21, 1
      %p91 = por %p89, %p90
      %p92 = scmp.ne.s32.totalorder %s81, %s82
      %p93 = scmp.eq.s32.totalorder %s21, 0
      %p94 = por %p92, %p93
      %p95 = scmp.ne.s32.totalorder %s81, %s82
      %p96 = scmp.eq.s32.totalorder %s22, 1
      %p97 = por %p95, %p96
      %p99 = scmp.ne.s32.totalorder %s82, %s98
      %p100 = scmp.eq.s32.totalorder %s22, 0
      %p101 = por %p99, %p100
      %s102 = ssub.s32 %s16, %s23
      %p103 = scmp.eq.s32.totalorder %s102, 0
      %s105 = sadd.s32 %s104, 1
      %s106 = scalar_select %p103, %s104, %s105
      %p109 = pneg %p103
      %p110 = scmp.eq.s32.totalorder %s16, 1
      %p111 = por %p109, %p110
      %p112 = scmp.ne.s32.totalorder %s104, %s107
      %p113 = scmp.eq.s32.totalorder %s16, 0
      %p114 = por %p112, %p113
      %p115 = scmp.ne.s32.totalorder %s104, %s107
      %p116 = scmp.eq.s32.totalorder %s21, 1
      %p117 = por %p115, %p116
      %p118 = scmp.ne.s32.totalorder %s107, %s108
      %p119 = scmp.eq.s32.totalorder %s21, 0
      %p120 = por %p118, %p119
      %p121 = scmp.ne.s32.totalorder %s107, %s108
      %p122 = scmp.eq.s32.totalorder %s22, 1
      %p123 = por %p121, %p122
      %p125 = scmp.ne.s32.totalorder %s108, %s124
      %p126 = scmp.eq.s32.totalorder %s22, 0
      %p127 = por %p125, %p126
      %s129 = sadd.s32 %s128, 1
      %p132 = scmp.eq.s32.totalorder %s16, 1
      %p133 = scmp.ne.s32.totalorder %s128, %s130
      %p134 = scmp.eq.s32.totalorder %s16, 0
      %p135 = por %p133, %p134
      %p136 = scmp.ne.s32.totalorder %s128, %s130
      %p137 = scmp.eq.s32.totalorder %s21, 1
      %p138 = por %p136, %p137
      %p139 = scmp.ne.s32.totalorder %s130, %s131
      %p140 = scmp.eq.s32.totalorder %s21, 0
      %p141 = por %p139, %p140
      %p142 = scmp.ne.s32.totalorder %s130, %s131
      %p143 = scmp.eq.s32.totalorder %s22, 1
      %p144 = por %p142, %p143
      %p146 = scmp.ne.s32.totalorder %s131, %s145
      %p147 = scmp.eq.s32.totalorder %s22, 0
      %p148 = por %p146, %p147
      %s150 = sadd.s32 %s149, 1
      %p153 = scmp.eq.s32.totalorder %s16, 1
      %p154 = scmp.ne.s32.totalorder %s149, %s151
      %p155 = scmp.eq.s32.totalorder %s16, 0
      %p156 = por %p154, %p155
      %p157 = scmp.ne.s32.totalorder %s149, %s151
      %p158 = scmp.eq.s32.totalorder %s21, 1
      %p159 = por %p157, %p158
      %p160 = scmp.ne.s32.totalorder %s151, %s152
      %p161 = scmp.eq.s32.totalorder %s21, 0
      %p162 = por %p160, %p161
      %p163 = scmp.ne.s32.totalorder %s151, %s152
      %p164 = scmp.eq.s32.totalorder %s22, 1
      %p165 = por %p163, %p164
      %p167 = scmp.ne.s32.totalorder %s152, %s166
      %p168 = scmp.eq.s32.totalorder %s22, 0
      %p169 = por %p167, %p168
      %s171 = sadd.s32 %s170, 1
      %p174 = scmp.eq.s32.totalorder %s16, 1
      %p175 = scmp.ne.s32.totalorder %s170, %s172
      %p176 = scmp.eq.s32.totalorder %s16, 0
      %p177 = por %p175, %p176
      %p178 = scmp.ne.s32.totalorder %s170, %s172
      %p179 = scmp.eq.s32.totalorder %s21, 1
      %p180 = por %p178, %p179
      %p181 = scmp.ne.s32.totalorder %s172, %s173
      %p182 = scmp.eq.s32.totalorder %s21, 0
      %p183 = por %p181, %p182
      %p184 = scmp.ne.s32.totalorder %s172, %s173
      %p185 = scmp.eq.s32.totalorder %s22, 1
      %p186 = por %p184, %p185
      %p188 = scmp.ne.s32.totalorder %s173, %s187
      %p189 = scmp.eq.s32.totalorder %s22, 0
      %p190 = por %p188, %p189
      %s191 = ssub.s32 %s16, %s23
      %p192 = scmp.eq.s32.totalorder %s191, 0
      %s194 = sadd.s32 %s193, 1
      %s195 = scalar_select %p192, %s193, %s194
      %p198 = pneg %p192
      %p199 = scmp.eq.s32.totalorder %s16, 1
      %p200 = por %p198, %p199
      %p201 = scmp.ne.s32.totalorder %s193, %s196
      %p202 = scmp.eq.s32.totalorder %s16, 0
      %p203 = por %p201, %p202
      %p204 = scmp.ne.s32.totalorder %s193, %s196
      %p205 = scmp.eq.s32.totalorder %s21, 1
      %p206 = por %p204, %p205
      %p207 = scmp.ne.s32.totalorder %s196, %s197
      %p208 = scmp.eq.s32.totalorder %s21, 0
      %p209 = por %p207, %p208
      %p210 = scmp.ne.s32.totalorder %s196, %s197
      %p211 = scmp.eq.s32.totalorder %s22, 1
      %p212 = por %p210, %p211
      %p214 = scmp.ne.s32.totalorder %s197, %s213
      %p215 = scmp.eq.s32.totalorder %s22, 0
      %p216 = por %p214, %p215
      %p217 = scmp.le.s32.totalorder 1, %s16
      %p218 = scmp.lt.s32.totalorder %s16, 3
      %p219 = pnand %p217, %p218
      %p220 = pneg %p219
      // Predicated region
      $region9: #{cnn_shop_mlp_forward.1} parent=5 // pred_check
        _
      $region10: #{cnn_shop_mlp_forward.1} parent=5 // pred_check_branch
        %222 = sbr.rel (%p219) target = $region12
      $region11: #{cnn_shop_mlp_forward.1} parent=5 // pred_region
        %s223 = ssub.s32 %s16, 1
        // Predicated region
        $region13: #{cnn_shop_mlp_forward.1} parent=11 // pred_check
          %p224 = pneg %p141
        $region14: #{cnn_shop_mlp_forward.1} parent=11 // pred_check_branch
          %226 = sbr.rel (%p224) target = $region16
        $region15: #{cnn_shop_mlp_forward.1} parent=11 // pred_region
          _
        $region16: #{cnn_shop_mlp_forward.1} parent=11 // pred_fallthru
          _
        // Predicated region
        $region17: #{cnn_shop_mlp_forward.1} parent=11 // pred_check
          %p227 = pneg %p162
        $region18: #{cnn_shop_mlp_forward.1} parent=11 // pred_check_branch
          %229 = sbr.rel (%p227) target = $region20
        $region19: #{cnn_shop_mlp_forward.1} parent=11 // pred_region
          _
        $region20: #{cnn_shop_mlp_forward.1} parent=11 // pred_fallthru
          _
        // Predicated region
        $region21: #{cnn_shop_mlp_forward.1} parent=11 // pred_check
          %p230 = pneg %p183
        $region22: #{cnn_shop_mlp_forward.1} parent=11 // pred_check_branch
          %232 = sbr.rel (%p230) target = $region24
        $region23: #{cnn_shop_mlp_forward.1} parent=11 // pred_region
          _
        $region24: #{cnn_shop_mlp_forward.1} parent=11 // pred_fallthru
          _
      $region12: #{cnn_shop_mlp_forward.1} parent=5 // pred_fallthru
        _
      %p233 = scmp.lt.s32.totalorder %s16, 2
      // Predicated region
      $region25: #{cnn_shop_mlp_forward.1} parent=5 // pred_check
        %p234 = pneg %p233
      $region26: #{cnn_shop_mlp_forward.1} parent=5 // pred_check_branch
        %236 = sbr.rel (%p234) target = $region28
      $region27: #{cnn_shop_mlp_forward.1} parent=5 // pred_region
        // Predicated region
        $region29: #{cnn_shop_mlp_forward.1} parent=27 // pred_check
          %p237 = pneg %p36
        $region30: #{cnn_shop_mlp_forward.1} parent=27 // pred_check_branch
          %239 = sbr.rel (%p237) target = $region32
        $region31: #{cnn_shop_mlp_forward.1} parent=27 // pred_region
          %p240 = scmp.lt.s32.totalorder %s16, 1
          %s241 = scalar_select %p240, %s16, 1
          %s242 = smul.addr %s241, 8
          %s243 = scalar_lea.vmem %s0, %s242
        $region32: #{cnn_shop_mlp_forward.1} parent=27 // pred_fallthru
          _
        // Predicated region
        $region33: #{cnn_shop_mlp_forward.1} parent=27 // pred_check
          %p244 = pneg %p62
        $region34: #{cnn_shop_mlp_forward.1} parent=27 // pred_check_branch
          %246 = sbr.rel (%p244) target = $region36
        $region35: #{cnn_shop_mlp_forward.1} parent=27 // pred_region
          %p247 = scmp.lt.s32.totalorder %s16, 1
          %s248 = scalar_select %p247, %s16, 1
          %s249 = smul.addr %s248, 8
          %s250 = scalar_lea.vmem %s1, %s249
        $region36: #{cnn_shop_mlp_forward.1} parent=27 // pred_fallthru
          _
        // Predicated region
        $region37: #{cnn_shop_mlp_forward.1} parent=27 // pred_check
          %p251 = pneg %p88
        $region38: #{cnn_shop_mlp_forward.1} parent=27 // pred_check_branch
          %253 = sbr.rel (%p251) target = $region40
        $region39: #{cnn_shop_mlp_forward.1} parent=27 // pred_region
          %p254 = scmp.lt.s32.totalorder %s16, 1
          %s255 = scalar_select %p254, %s16, 1
          %s256 = smul.addr %s255, 8
          %s257 = scalar_lea.vmem %s2, %s256
        $region40: #{cnn_shop_mlp_forward.1} parent=27 // pred_fallthru
          _
        // Predicated region
        $region41: #{cnn_shop_mlp_forward.1} parent=27 // pred_check
          %p258 = pneg %p114
        $region42: #{cnn_shop_mlp_forward.1} parent=27 // pred_check_branch
          %260 = sbr.rel (%p258) target = $region44
        $region43: #{cnn_shop_mlp_forward.1} parent=27 // pred_region
          %p261 = scmp.lt.s32.totalorder %s16, 1
          %s262 = scalar_select %p261, %s16, 1
          %s263 = smul.addr %s262, 8
          %s264 = scalar_lea.vmem %s3, %s263
        $region44: #{cnn_shop_mlp_forward.1} parent=27 // pred_fallthru
          _
      $region28: #{cnn_shop_mlp_forward.1} parent=5 // pred_fallthru
        _
      %p265 = scmp.le.s32.totalorder 1, %s16
      %p266 = scmp.lt.s32.totalorder %s16, 3
      %p267 = pnand %p265, %p266
      %p268 = pneg %p267
      // Predicated region
      $region45: #{cnn_shop_mlp_forward.1} parent=5 // pred_check
        _
      $region46: #{cnn_shop_mlp_forward.1} parent=5 // pred_check_branch
        %270 = sbr.rel (%p267) target = $region48
      $region47: #{cnn_shop_mlp_forward.1} parent=5 // pred_region
        %s271 = ssub.s32 %s16, 1
        %p272 = scmp.lt.s32.totalorder %s21, 1
        %s273 = scalar_select %p272, %s21, 1
        %s274 = smul.addr %s273, 8
        %s275 = scalar_lea.vmem %s0, %s274
        %p276 = pneg %p42
        %p277 = pneg %p39
        %p278 = scmp.lt.s32.totalorder %s21, 1
        %s279 = scalar_select %p278, %s21, 1
        %s280 = smul.addr %s279, 8
        %s281 = scalar_lea.vmem %s1, %s280
        %p282 = pneg %p68
        %p283 = pneg %p65
        %p284 = scmp.lt.s32.totalorder %s21, 1
        %s285 = scalar_select %p284, %s21, 1
        %s286 = smul.addr %s285, 8
        %s287 = scalar_lea.vmem %s2, %s286
        %p288 = pneg %p94
        %p289 = pneg %p91
        %p290 = scmp.lt.s32.totalorder %s21, 1
        %s291 = scalar_select %p290, %s21, 1
        %s292 = smul.addr %s291, 8
        %s293 = scalar_lea.vmem %s3, %s292
        %p294 = pneg %p120
        %p295 = pneg %p117
        %p296 = pneg %p141
        %p297 = pneg %p138
        %p298 = pneg %p162
        %p299 = pneg %p159
        %p300 = pneg %p183
        %p301 = pneg %p180
        %p302 = pneg %p209
        %p303 = pneg %p206
        %s304 = sand.u32 %s196, 1
        %s305 = scalar_lea.sflag [#allocation3], %s304
        %s306 = sand.u32 %s196, 1
        %s307 = smul.addr %s306, 8
        %s308 = scalar_lea.vmem [#allocation2], %s307
        %p309 = scmp.lt.s32.totalorder %s21, 1
        %s310 = scalar_select %p309, %s21, 1
        %s311 = smul.addr %s310, 8
        %s312 = scalar_lea.vmem %s0, %s311
        %p313 = scmp.lt.s32.totalorder %s21, 1
        %s314 = scalar_select %p313, %s21, 1
        %s315 = smul.addr %s314, 8
        %s316 = scalar_lea.vmem %s1, %s315
        %p317 = scmp.lt.s32.totalorder %s21, 1
        %s318 = scalar_select %p317, %s21, 1
        %s319 = smul.addr %s318, 8
        %s320 = scalar_lea.vmem %s2, %s319
        %p321 = scmp.lt.s32.totalorder %s21, 1
        %s322 = scalar_select %p321, %s21, 1
        %s323 = smul.addr %s322, 8
        %s324 = scalar_lea.vmem %s3, %s323
        %v326 = vld [vmem:[%s312] sm:$0xff]
        %v327 = vpack.c.bf16 %v326, %v326
        %v328 = vld [vmem:[%s4] sm:$0xf]
        %v329 = vld [vmem:[%s4 + $0x4] sm:$0xf]
        %v330 = vld [vmem:[%s316] sm:$0xff]
        %v331 = vpack.c.bf16 %v330, %v330
        %v332 = vld [vmem:[%s4 + $0x8] sm:$0xf]
        %vm333 = vcmask 64512
        %v335 = vsel %vm333, %v331, 0
        %vm337 = vcmask 1043456
        %v339 = vsel %vm337, %v332, 0
        %341 = vmatprep.subr.bf16.mxu0 0
        %342 = vmatpush1.bf16.msra.mxu0 %v339
        %343 = vmatprep.subr.bf16.mxu0 0
        %344 = vmatpush1.bf16.msra.mxu0 0
        %345 = vmatprep.subr.bf16.mxu0 0
        %346 = vmatpush1.bf16.msra.mxu0 0
        %347 = vmatprep.subr.bf16.mxu0 0
        %348 = vmatpush1.bf16.msra.mxu0 0
        %349 = vmatprep.subr.bf16.mxu0 0
        %350 = vmatpush1.bf16.msra.mxu0 0
        %351 = vmatprep.subr.bf16.mxu0 0
        %352 = vmatpush1.bf16.msra.mxu0 0
        %353 = vmatprep.subr.bf16.mxu0 0
        %354 = vmatpush1.bf16.msra.mxu0 0
        %355 = vmatprep.subr.bf16.mxu0 0
        %356 = vmatpush1.bf16.msra.mxu0 0
        %357 = vmatprep.subr.bf16.mxu0 0
        %358 = vmatpush1.bf16.msra.mxu0 0
        %359 = vmatprep.subr.bf16.mxu0 0
        %360 = vmatpush1.bf16.msra.mxu0 0
        %361 = vmatprep.subr.bf16.mxu0 0
        %362 = vmatpush1.bf16.msra.mxu0 0
        %363 = vmatprep.subr.bf16.mxu0 0
        %364 = vmatpush1.bf16.msra.mxu0 0
        %365 = vmatprep.subr.bf16.mxu0 0
        %366 = vmatpush1.bf16.msra.mxu0 0
        %367 = vmatprep.subr.bf16.mxu0 0
        %368 = vmatpush1.bf16.msra.mxu0 0
        %369 = vmatprep.subr.bf16.mxu0 0
        %370 = vmatpush1.bf16.msra.mxu0 0
        %371 = vmatprep.subr.bf16.mxu0 0
        %372 = vmatpush1.bf16.msra.mxu0 0
        %373 = vmatprep.mubr.bf16.mxu0 0
        %374 = vmatmul.mubr.bf16.gmra.mrb[0].mxu0 %v335
        %v375 = vpop.f32.mrb[0].mxu0
        %v376 = vadd.f32 0.0, %v375
        %v377 = vpop.f32.mrb[0].mxu0
        %v378 = vpop.f32.mrb[0].mxu0
        %v379 = vpop.f32.mrb[0].mxu0
        %380 = vdwg.mxu0
        %v383 = vunpack.c.l.b16 %v328
        %v384 = vunpack.c.l.b16 %v329
        %v385 = vpack.c.b16 %v384, %v383
        %vm387 = vcmask 130048
        %v389 = vsel %vm387, %v327, 0
        %391 = vmatprep.subr.bf16.mxu0 0
        %392 = vmatpush1.bf16.msra.mxu0 %v385
        %393 = vmatprep.subr.bf16.mxu0 0
        %394 = vmatpush1.bf16.msra.mxu0 0
        %395 = vmatprep.subr.bf16.mxu0 0
        %396 = vmatpush1.bf16.msra.mxu0 0
        %397 = vmatprep.subr.bf16.mxu0 0
        %398 = vmatpush1.bf16.msra.mxu0 0
        %399 = vmatprep.subr.bf16.mxu0 0
        %400 = vmatpush1.bf16.msra.mxu0 0
        %401 = vmatprep.subr.bf16.mxu0 0
        %402 = vmatpush1.bf16.msra.mxu0 0
        %403 = vmatprep.subr.bf16.mxu0 0
        %404 = vmatpush1.bf16.msra.mxu0 0
        %405 = vmatprep.subr.bf16.mxu0 0
        %406 = vmatpush1.bf16.msra.mxu0 0
        %407 = vmatprep.subr.bf16.mxu0 0
        %408 = vmatpush1.bf16.msra.mxu0 0
        %409 = vmatprep.subr.bf16.mxu0 0
        %410 = vmatpush1.bf16.msra.mxu0 0
        %411 = vmatprep.subr.bf16.mxu0 0
        %412 = vmatpush1.bf16.msra.mxu0 0
        %413 = vmatprep.subr.bf16.mxu0 0
        %414 = vmatpush1.bf16.msra.mxu0 0
        %415 = vmatprep.subr.bf16.mxu0 0
        %416 = vmatpush1.bf16.msra.mxu0 0
        %417 = vmatprep.subr.bf16.mxu0 0
        %418 = vmatpush1.bf16.msra.mxu0 0
        %419 = vmatprep.subr.bf16.mxu0 0
        %420 = vmatpush1.bf16.msra.mxu0 0
        %421 = vmatprep.subr.bf16.mxu0 0
        %422 = vmatpush1.bf16.msra.mxu0 0
        %423 = vmatprep.mubr.bf16.mxu0 0
        %424 = vmatmul.mubr.bf16.gmra.mrb[0].mxu0 %v389
        %v425 = vpop.f32.mrb[0].mxu0
        %v426 = vadd.f32 %v376, %v425
        %v427 = vpop.f32.mrb[0].mxu0
        %v428 = vpop.f32.mrb[0].mxu0
        %v429 = vpop.f32.mrb[0].mxu0
        %430 = vdwg.mxu0
        %v431 = vld [vmem:[%s320] sm:$0xff]
        %v432 = vpack.c.bf16 %v431, %v431
        %v433 = vld [vmem:[%s4 + $0xc] sm:$0x7]
        %vm434 = vcmask 39936
        %v436 = vsel %vm434, %v432, 0
        %vm438 = vcmask 1041408
        %vm439 = vcmask 1042432
        %v440 = vsel %vm438, 4294967295, 65535
        %v441 = vsel %vm439, %v440, 0
        %v443 = vand.u32 %v433, %v441
        %445 = vmatprep.subr.bf16.mxu0 0
        %446 = vmatpush1.bf16.msra.mxu0 %v443
        %447 = vmatprep.subr.bf16.mxu0 0
        %448 = vmatpush1.bf16.msra.mxu0 0
        %449 = vmatprep.subr.bf16.mxu0 0
        %450 = vmatpush1.bf16.msra.mxu0 0
        %451 = vmatprep.subr.bf16.mxu0 0
        %452 = vmatpush1.bf16.msra.mxu0 0
        %453 = vmatprep.subr.bf16.mxu0 0
        %454 = vmatpush1.bf16.msra.mxu0 0
        %455 = vmatprep.subr.bf16.mxu0 0
        %456 = vmatpush1.bf16.msra.mxu0 0
        %457 = vmatprep.subr.bf16.mxu0 0
        %458 = vmatpush1.bf16.msra.mxu0 0
        %459 = vmatprep.subr.bf16.mxu0 0
        %460 = vmatpush1.bf16.msra.mxu0 0
        %461 = vmatprep.subr.bf16.mxu0 0
        %462 = vmatpush1.bf16.msra.mxu0 0
        %463 = vmatprep.subr.bf16.mxu0 0
        %464 = vmatpush1.bf16.msra.mxu0 0
        %465 = vmatprep.subr.bf16.mxu0 0
        %466 = vmatpush1.bf16.msra.mxu0 0
        %467 = vmatprep.subr.bf16.mxu0 0
        %468 = vmatpush1.bf16.msra.mxu0 0
        %469 = vmatprep.subr.bf16.mxu0 0
        %470 = vmatpush1.bf16.msra.mxu0 0
        %471 = vmatprep.subr.bf16.mxu0 0
        %472 = vmatpush1.bf16.msra.mxu0 0
        %473 = vmatprep.subr.bf16.mxu0 0
        %474 = vmatpush1.bf16.msra.mxu0 0
        %475 = vmatprep.subr.bf16.mxu0 0
        %476 = vmatpush1.bf16.msra.mxu0 0
        %477 = vmatprep.mubr.bf16.mxu0 0
        %478 = vmatmul.mubr.bf16.gmra.mrb[0].mxu0 %v436
        %v479 = vpop.f32.mrb[0].mxu0
        %v480 = vadd.f32 0.0, %v479
        %v481 = vpop.f32.mrb[0].mxu0
        %v482 = vpop.f32.mrb[0].mxu0
        %v483 = vpop.f32.mrb[0].mxu0
        %484 = vdwg.mxu0
        %v485 = vadd.f32 %v426, %v480
        %v486 = vld [vmem:[%s324] sm:$0xff]
        %v487 = vpack.c.bf16 %v486, %v486
        %v488 = vld [vmem:[%s4 + $0x10] sm:$0x3]
        %vm489 = vcmask 23552
        %v491 = vsel %vm489, %v487, 0
        %vm493 = vcmask 1040384
        %v494 = vsel %vm493, 4294967295, 65535
        %v495 = vsel %vm438, %v494, 0
        %v497 = vand.u32 %v488, %v495
        %499 = vmatprep.subr.bf16.mxu0 0
        %500 = vmatpush1.bf16.msra.mxu0 %v497
        %501 = vmatprep.subr.bf16.mxu0 0
        %502 = vmatpush1.bf16.msra.mxu0 0
        %503 = vmatprep.subr.bf16.mxu0 0
        %504 = vmatpush1.bf16.msra.mxu0 0
        %505 = vmatprep.subr.bf16.mxu0 0
        %506 = vmatpush1.bf16.msra.mxu0 0
        %507 = vmatprep.subr.bf16.mxu0 0
        %508 = vmatpush1.bf16.msra.mxu0 0
        %509 = vmatprep.subr.bf16.mxu0 0
        %510 = vmatpush1.bf16.msra.mxu0 0
        %511 = vmatprep.subr.bf16.mxu0 0
        %512 = vmatpush1.bf16.msra.mxu0 0
        %513 = vmatprep.subr.bf16.mxu0 0
        %514 = vmatpush1.bf16.msra.mxu0 0
        %515 = vmatprep.subr.bf16.mxu0 0
        %516 = vmatpush1.bf16.msra.mxu0 0
        %517 = vmatprep.subr.bf16.mxu0 0
        %518 = vmatpush1.bf16.msra.mxu0 0
        %519 = vmatprep.subr.bf16.mxu0 0
        %520 = vmatpush1.bf16.msra.mxu0 0
        %521 = vmatprep.subr.bf16.mxu0 0
        %522 = vmatpush1.bf16.msra.mxu0 0
        %523 = vmatprep.subr.bf16.mxu0 0
        %524 = vmatpush1.bf16.msra.mxu0 0
        %525 = vmatprep.subr.bf16.mxu0 0
        %526 = vmatpush1.bf16.msra.mxu0 0
        %527 = vmatprep.subr.bf16.mxu0 0
        %528 = vmatpush1.bf16.msra.mxu0 0
        %529 = vmatprep.subr.bf16.mxu0 0
        %530 = vmatpush1.bf16.msra.mxu0 0
        %531 = vmatprep.mubr.bf16.mxu0 0
        %532 = vmatmul.mubr.bf16.gmra.mrb[0].mxu0 %v491
        %v533 = vpop.f32.mrb[0].mxu0
        %v534 = vadd.f32 0.0, %v533
        %v535 = vpop.f32.mrb[0].mxu0
        %v536 = vpop.f32.mrb[0].mxu0
        %v537 = vpop.f32.mrb[0].mxu0
        %538 = vdwg.mxu0
        %v539 = vadd.f32 %v485, %v534
        %v540 = vld [vmem:[%s5] sm:$0x1]
        %v542 = vlaneseq
        %v543 = vshrl.u32 %v542, 7
        %v544 = vsub.s32 0, %v543
        %v545 = vrot.slane %v540, %v544
        %v547 = vadd.f32 %v539, %v545
        %v548 = vmax.f32 %v547, 0.0
        %v549 = vpack.c.bf16 %v548, %v548
        %v550 = vld [vmem:[%s6] sm:$0xf]
        %v551 = vld [vmem:[%s6 + $0x4] sm:$0xf]
        %v552 = vld [vmem:[%s6 + $0x8] sm:$0xf]
        %v553 = vld [vmem:[%s6 + $0xc] sm:$0xf]
        %v554 = vld [vmem:[%s6 + $0x10] sm:$0xf]
        %v555 = vld [vmem:[%s6 + $0x14] sm:$0xf]
        %v556 = vld [vmem:[%s6 + $0x18] sm:$0xf]
        %v557 = vld [vmem:[%s6 + $0x1c] sm:$0xf]
        %v558 = vld [vmem:[%s6 + $0x20] sm:$0xf]
        %v559 = vld [vmem:[%s6 + $0x24] sm:$0xf]
        %v560 = vld [vmem:[%s6 + $0x28] sm:$0xf]
        %v561 = vld [vmem:[%s6 + $0x2c] sm:$0xf]
        %v562 = vld [vmem:[%s6 + $0x30] sm:$0xf]
        %v563 = vld [vmem:[%s6 + $0x34] sm:$0xf]
        %v564 = vld [vmem:[%s6 + $0x38] sm:$0xf]
        %v565 = vld [vmem:[%s6 + $0x3c] sm:$0xf]
        %s566 = scalar_lea.vmem %s5, 1
        %v567 = vld [vmem:[%s566] sm:$0x1]
        %v569 = vlaneseq
        %v570 = vshrl.u32 %v569, 7
        %v571 = vsub.s32 0, %v570
        %v572 = vrot.slane %v567, %v571
        %v590 = vunpack.c.l.b16 %v550
        %v591 = vunpack.c.l.b16 %v551
        %v592 = vunpack.c.l.b16 %v552
        %v593 = vunpack.c.l.b16 %v553
        %v594 = vunpack.c.l.b16 %v554
        %v595 = vunpack.c.l.b16 %v555
        %v596 = vunpack.c.l.b16 %v556
        %v597 = vunpack.c.l.b16 %v557
        %v598 = vunpack.c.l.b16 %v558
        %v599 = vunpack.c.l.b16 %v559
        %v600 = vunpack.c.l.b16 %v560
        %v601 = vunpack.c.l.b16 %v561
        %v602 = vunpack.c.l.b16 %v562
        %v603 = vunpack.c.l.b16 %v563
        %v604 = vunpack.c.l.b16 %v564
        %v605 = vunpack.c.l.b16 %v565
        %v606 = vpack.c.b16 %v591, %v590
        %v607 = vpack.c.b16 %v593, %v592
        %v608 = vpack.c.b16 %v595, %v594
        %v609 = vpack.c.b16 %v597, %v596
        %v610 = vpack.c.b16 %v599, %v598
        %v611 = vpack.c.b16 %v601, %v600
        %v612 = vpack.c.b16 %v603, %v602
        %v613 = vpack.c.b16 %v605, %v604
        %622 = vmatprep.subr.bf16.mxu0 0
        %623 = vmatpush1.bf16.msra.mxu0 %v606
        %624 = vmatprep.subr.bf16.mxu0 0
        %625 = vmatpush1.bf16.msra.mxu0 %v607
        %626 = vmatprep.subr.bf16.mxu0 0
        %627 = vmatpush1.bf16.msra.mxu0 %v608
        %628 = vmatprep.subr.bf16.mxu0 0
        %629 = vmatpush1.bf16.msra.mxu0 %v609
        %630 = vmatprep.subr.bf16.mxu0 0
        %631 = vmatpush1.bf16.msra.mxu0 %v610
        %632 = vmatprep.subr.bf16.mxu0 0
        %633 = vmatpush1.bf16.msra.mxu0 %v611
        %634 = vmatprep.subr.bf16.mxu0 0
        %635 = vmatpush1.bf16.msra.mxu0 %v612
        %636 = vmatprep.subr.bf16.mxu0 0
        %637 = vmatpush1.bf16.msra.mxu0 %v613
        %638 = vmatprep.subr.bf16.mxu0 0
        %639 = vmatpush1.bf16.msra.mxu0 0
        %640 = vmatprep.subr.bf16.mxu0 0
        %641 = vmatpush1.bf16.msra.mxu0 0
        %642 = vmatprep.subr.bf16.mxu0 0
        %643 = vmatpush1.bf16.msra.mxu0 0
        %644 = vmatprep.subr.bf16.mxu0 0
        %645 = vmatpush1.bf16.msra.mxu0 0
        %646 = vmatprep.subr.bf16.mxu0 0
        %647 = vmatpush1.bf16.msra.mxu0 0
        %648 = vmatprep.subr.bf16.mxu0 0
        %649 = vmatpush1.bf16.msra.mxu0 0
        %650 = vmatprep.subr.bf16.mxu0 0
        %651 = vmatpush1.bf16.msra.mxu0 0
        %652 = vmatprep.subr.bf16.mxu0 0
        %653 = vmatpush1.bf16.msra.mxu0 0
        %654 = vmatprep.mubr.bf16.mxu0 0
        %655 = vmatmul.mubr.bf16.gmra.mrb[0].mxu0 %v549
        %v656 = vpop.f32.mrb[0].mxu0
        %v657 = vadd.f32 %v572, %v656
        %v658 = vpop.f32.mrb[0].mxu0
        %v659 = vpop.f32.mrb[0].mxu0
        %v660 = vpop.f32.mrb[0].mxu0
        %661 = vdwg.mxu0
        %v662 = vmax.f32 %v657, 0.0
        %vm663 = vcmask 261120
        %664 = vst.msk [vmem:[%s308] sm:$0xff] %vm663, %v662
        %s665 = sand.u32 %s196, 1
        %s666 = scalar_lea.sflag [#allocation3], %s665
        %s667 = sand.u32 %s196, 1
        %s668 = smul.addr %s667, 8
        %s669 = scalar_lea.vmem [#allocation2], %s668
        // Predicated region
        $region49: #{cnn_shop_mlp_forward.1} parent=47 // pred_check
          %p670 = pneg %p206
        $region50: #{cnn_shop_mlp_forward.1} parent=47 // pred_check_branch
          %672 = sbr.rel (%p670) target = $region52
        $region51: #{cnn_shop_mlp_forward.1} parent=47 // pred_region
          %s674 = ssub.s32 128, 128
          %675 = vsyncadd %s666, %s674
          %s676 = smul.addr %s21, 128
          %s677 = scalar_lea.hbm %s7, %s676
          %s679 = sshll.u32 %s669, 4
          %s680 = int_to_ptr.vmem [resolvable:$true] %s679
          %682 = dma.vmem_to_hbm [thread:$0]  %s680, 128, %s677, %s666
        $region52: #{cnn_shop_mlp_forward.1} parent=47 // pred_fallthru
          _
      $region48: #{cnn_shop_mlp_forward.1} parent=5 // pred_fallthru
        _
      %p683 = scmp.le.s32.totalorder 2, %s16
      // Predicated region
      $region53: #{cnn_shop_mlp_forward.1} parent=5 // pred_check
        %p684 = pneg %p683
      $region54: #{cnn_shop_mlp_forward.1} parent=5 // pred_check_branch
        %686 = sbr.rel (%p684) target = $region56
      $region55: #{cnn_shop_mlp_forward.1} parent=5 // pred_region
        %s687 = ssub.s32 %s16, 2
        // Predicated region
        $region57: #{cnn_shop_mlp_forward.1} parent=55 // pred_check
          %p688 = pneg %p212
        $region58: #{cnn_shop_mlp_forward.1} parent=55 // pred_check_branch
          %690 = sbr.rel (%p688) target = $region60
        $region59: #{cnn_shop_mlp_forward.1} parent=55 // pred_region
          %s691 = sand.u32 %s197, 1
          %s692 = scalar_lea.sflag [#allocation3], %s691
          %s693 = sand.u32 %s197, 1
          %s694 = smul.addr %s693, 8
          %s695 = scalar_lea.vmem [#allocation2], %s694
          %696 = dma.done %s692, 128
        $region60: #{cnn_shop_mlp_forward.1} parent=55 // pred_fallthru
          _
      $region56: #{cnn_shop_mlp_forward.1} parent=5 // pred_fallthru
        _
    $region6: #{cnn_shop_mlp_forward.1} parent=1 // loop_footer
      %s20 = sadd.s32 1, %s16
    $region7: #{cnn_shop_mlp_forward.1} parent=1 // loop_footer_branch
      %15 = sbr.rel target = $region3
    $region8: #{cnn_shop_mlp_forward.1} parent=1 // loop_exit
      _
    %697 = vsyncpa [#allocation3], 1
    %s698 = scalar_lea.sflag [#allocation3], 1
    %699 = vsyncpa %s698, 1

</llo_original>
